<compile_context>
chip_gen: v7x
topology: tpu7x:2x2x1
jax: 0.10.0
libtpu: 0.0.40
codegen_flags: <defaults>
</compile_context>

<pallas_src>
import functools
import math

import jax
import jax.numpy as jnp
from jax import lax
from jax.experimental import pallas as pl
from jax.experimental.pallas import tpu as pltpu


def _round_up(x, m):
    return ((x + m - 1) // m) * m


def _sigmoid(x):
    # sigmoid(x) == 0.5 * tanh(0.5 * x) + 0.5   (single EUP op, no exp+recip)
    return 0.5 * jnp.tanh(0.5 * x) + 0.5


def _lstm_cell_kernel(x_ref, h_ref, c_ref, wx_ref, wh_ref, b_ref,
                      h_out_ref, c_out_ref, *, tn):
    # Two MXU passes sharing one f32 accumulator: x @ Wx + h @ Wh.
    lm = jnp.dot(x_ref[...], wx_ref[...], preferred_element_type=jnp.float32)
    lm = lm + jnp.dot(h_ref[...], wh_ref[...], preferred_element_type=jnp.float32)
    lm = lm + b_ref[...]            # f32 bias; forget_bias already folded into f.

    # Gate chunks are lane-aligned static slices inside this H-tile: i, j, f, o.
    i = lm[:, 0 * tn:1 * tn]
    j = lm[:, 1 * tn:2 * tn]
    f = lm[:, 2 * tn:3 * tn]
    o = lm[:, 3 * tn:4 * tn]

    c_prev = c_ref[...]             # f32
    c = _sigmoid(f) * c_prev + _sigmoid(i) * jnp.tanh(j)
    h = _sigmoid(o) * jnp.tanh(c)

    h_out_ref[...] = h.astype(h_out_ref.dtype)
    c_out_ref[...] = c              # cell state stays f32


def _vmem_capacity_bytes():
    try:
        cap = int(pltpu.get_tpu_info().vmem_capacity_bytes)
        if cap > 0:
            return cap
    except Exception:
        pass
    return 64 * 1024 * 1024         # v7x-safe conservative fallback


def _choose_tiles(B, I, H, w_bytes, act_bytes, out_bytes):
    """Pick (TB, TN, vmem_limit_bytes) against the per-generation VMEM budget."""
    phys = _vmem_capacity_bytes()
    budget = int(phys * 0.70)
    Ip = _round_up(max(I, 1), 128)
    Hp128 = _round_up(H, 128)
    Bp8 = _round_up(max(B, 1), 8)
    tn_cands = sorted({min(t, Hp128) for t in (512, 256, 128)}, reverse=True)
    tb_cands = sorted({min(t, Bp8) for t in (512, 256, 128)}, reverse=True)

    def need(tb, tn):
        Hp = _round_up(H, tn)
        per = (tb * Ip * act_bytes          # x block
               + tb * Hp * act_bytes        # h block
               + tb * tn * 4                # c_prev block (f32)
               + Ip * 4 * tn * w_bytes      # Wx block
               + Hp * 4 * tn * w_bytes      # Wh block
               + 4 * tn * 4                 # bias block
               + tb * tn * out_bytes        # h_out block
               + tb * tn * 4)               # c_out block (f32)
        return 2 * per + (2 << 20)          # double buffering + slack

    choice = None
    for tn in tn_cands:
        for tb in tb_cands:
            if need(tb, tn) <= budget:
                choice = (tb, tn)
                break
        if choice is not None:
            break
    if choice is None:
        choice = (tb_cands[-1], tn_cands[-1])
    tb, tn = choice
    vmem_limit = int(min(phys - (2 << 20), max(need(tb, tn) + (8 << 20), 32 << 20)))
    return tb, tn, vmem_limit


def _regroup_gate_cols(w2d, H, Hp, n_h, tn, rows_pad):
    """(K0, 4H) gate-major cols -> (rows_pad, n_h*4*tn): gates grouped per H-tile."""
    k0 = w2d.shape[0]
    w4 = w2d.reshape(k0, 4, H)
    w4 = jnp.pad(w4, ((0, rows_pad - k0), (0, 0), (0, Hp - H)))
    return (w4.reshape(rows_pad, 4, n_h, tn)
              .transpose(0, 2, 1, 3)
              .reshape(rows_pad, n_h * 4 * tn))


def my_lstm_cell(inputs_, h_p, c_p, weight, bias, forget_bias=1.0,
                 param_dtype=None, block_b=None, block_h=None):
    """JAX/Pallas equivalent of MyLSTMCell.forward.

    inputs_: (B, I)   h_p: (B, H)   c_p: (B, H)
    weight:  (4H, I + H)  (PyTorch F.linear convention, gate order i, j, f, o)
    bias:    (4H,) or None
    param_dtype: optional dtype (e.g. jnp.bfloat16) for weights + x/h fed to the
                 MXU; accumulation, bias and gate math stay f32, c stays f32.
    returns: (h, c) each (B, H).
    """
    B, I = inputs_.shape
    H = h_p.shape[1]
    assert weight.shape == (4 * H, I + H)
    out_dtype = inputs_.dtype
    compute_dtype = param_dtype if param_dtype is not None else jnp.float32

    w_bytes = jnp.dtype(compute_dtype).itemsize
    act_bytes = jnp.dtype(compute_dtype).itemsize
    out_bytes = jnp.dtype(out_dtype).itemsize
    TB, TN, vmem_limit = _choose_tiles(B, I, H, w_bytes, act_bytes, out_bytes)
    if block_b is not None:
        TB = block_b
    if block_h is not None:
        TN = block_h

    Ip = _round_up(max(I, 1), 128)
    Hp = _round_up(H, TN)
    Bp = _round_up(B, TB)
    n_b, n_h = Bp // TB, Hp // TN

    # ---- one-time parameter re-layout (hoist out of any recurrent loop) ------
    w_t = jnp.transpose(weight).astype(compute_dtype)       # (I+H, 4H), gate-major cols
    wx_r = _regroup_gate_cols(w_t[:I], H, Hp, n_h, TN, Ip)   # (Ip, 4*Hp)
    wh_r = _regroup_gate_cols(w_t[I:], H, Hp, n_h, TN, Hp)   # (Hp, 4*Hp)

    if bias is None:
        b4 = jnp.zeros((4, Hp), jnp.float32)
    else:
        b4 = jnp.pad(bias.astype(jnp.float32).reshape(4, H), ((0, 0), (0, Hp - H)))
    b4 = b4.at[2].add(jnp.float32(forget_bias))              # fold forget_bias into f
    b_r = b4.reshape(4, n_h, TN).transpose(1, 0, 2).reshape(1, n_h * 4 * TN)

    # ---- activations (no concat; x and h stay separate operands) -------------
    x_p = jnp.pad(inputs_.astype(compute_dtype), ((0, Bp - B), (0, Ip - I)))
    h_in = jnp.pad(h_p.astype(compute_dtype), ((0, Bp - B), (0, Hp - H)))
    c_prev = jnp.pad(c_p.astype(jnp.float32), ((0, Bp - B), (0, Hp - H)))

    cost = pl.CostEstimate(
        flops=int(2 * Bp * (Ip + Hp) * 4 * Hp),
        transcendentals=int(5 * Bp * Hp),
        bytes_accessed=int(wx_r.size * w_bytes + wh_r.size * w_bytes
                           + x_p.size * act_bytes + h_in.size * act_bytes
                           + 3 * Bp * Hp * 4),
    )

    # Grid: H-tiles OUTER (megacore splits the weight across cores on v7x),
    # batch INNER -> weight/bias block indices are constant along the inner
    # axis, so each weight column-group is DMA'd from HBM exactly once.
    semantics = ("parallel", "parallel" if n_h == 1 else "arbitrary")

    h_pad, c_pad = pl.pallas_call(
        functools.partial(_lstm_cell_kernel, tn=TN),
        grid=(n_h, n_b),
        in_specs=[
            pl.BlockSpec((TB, Ip), lambda n, b: (b, 0)),        # x
            pl.BlockSpec((TB, Hp), lambda n, b: (b, 0)),        # h_prev
            pl.BlockSpec((TB, TN), lambda n, b: (b, n)),        # c_prev (f32)
            pl.BlockSpec((Ip, 4 * TN), lambda n, b: (0, n)),    # Wx: fixed on inner axis
            pl.BlockSpec((Hp, 4 * TN), lambda n, b: (0, n)),    # Wh: fixed on inner axis
            pl.BlockSpec((1, 4 * TN), lambda n, b: (0, n)),     # bias (f32)
        ],
        out_specs=(
            pl.BlockSpec((TB, TN), lambda n, b: (b, n)),        # h
            pl.BlockSpec((TB, TN), lambda n, b: (b, n)),        # c (f32)
        ),
        out_shape=(
            jax.ShapeDtypeStruct((Bp, Hp), out_dtype),
            jax.ShapeDtypeStruct((Bp, Hp), jnp.float32),
        ),
        compiler_params=pltpu.CompilerParams(
            dimension_semantics=semantics,
            vmem_limit_bytes=vmem_limit),
        cost_estimate=cost,
    )(x_p, h_in, c_prev, wx_r, wh_r, b_r)

    # Note: recurrent callers should keep the returned c in f32 between steps.
    return h_pad[:B, :H], c_pad[:B, :H].astype(c_p.dtype)


def _reference(inputs_, h_p, c_p, weight, bias, forget_bias=1.0):
    xh = jnp.concatenate([inputs_, h_p], axis=1)
    lm = jnp.dot(xh, weight.T, precision=lax.Precision.HIGHEST)
    if bias is not None:
        lm = lm + bias
    i, j, f, o = jnp.split(lm, 4, axis=1)
    c = jax.nn.sigmoid(f + forget_bias) * c_p + jax.nn.sigmoid(i) * jnp.tanh(j)
    h = jax.nn.sigmoid(o) * jnp.tanh(c)
    return h, c


if __name__ == "__main__":
    # Small shapes consistent with the module's single-step forward.
    B, I, H = 8, 16, 32
    forget_bias = 1.0

    key = jax.random.PRNGKey(0)
    k_w, k_x, k_h, k_c = jax.random.split(key, 4)

    # Deterministic init mirroring reset_parameters(): xavier_uniform weight, zero bias.
    fan_out, fan_in = 4 * H, I + H
    bound = math.sqrt(6.0 / (fan_in + fan_out))
    weight = jax.random.uniform(k_w, (4 * H, I + H), jnp.float32, -bound, bound)
    bias = jnp.zeros((4 * H,), jnp.float32)

    inputs_ = jax.random.normal(k_x, (B, I), jnp.float32)
    h_p = jax.random.normal(k_h, (B, H), jnp.float32)
    c_p = jax.random.normal(k_c, (B, H), jnp.float32)

    # f32 path.
    h, c = my_lstm_cell(inputs_, h_p, c_p, weight, bias, forget_bias)
    jax.block_until_ready((h, c))
    h_ref, c_ref = _reference(inputs_, h_p, c_p, weight, bias, forget_bias)
    assert jnp.allclose(h, h_ref, atol=1e-4, rtol=1e-4), "h mismatch (f32)"
    assert jnp.allclose(c, c_ref, atol=1e-4, rtol=1e-4), "c mismatch (f32)"

    # Un-aligned shapes exercise the padding path (bias=None).
    B2, I2, H2 = 5, 7, 20
    k2 = jax.random.split(jax.random.PRNGKey(1), 4)
    w2 = jax.random.uniform(k2[0], (4 * H2, I2 + H2), jnp.float32, -0.2, 0.2)
    x2 = jax.random.normal(k2[1], (B2, I2), jnp.float32)
    hp2 = jax.random.normal(k2[2], (B2, H2), jnp.float32)
    cp2 = jax.random.normal(k2[3], (B2, H2), jnp.float32)
    h2, c2 = my_lstm_cell(x2, hp2, cp2, w2, None, 1.0)
    jax.block_until_ready((h2, c2))
    h2r, c2r = _reference(x2, hp2, cp2, w2, None, 1.0)
    assert jnp.allclose(h2, h2r, atol=1e-4, rtol=1e-4), "h mismatch (unaligned)"
    assert jnp.allclose(c2, c2r, atol=1e-4, rtol=1e-4), "c mismatch (unaligned)"

    # bf16 weights/activations path (halves the weight HBM stream), loose tolerance.
    h3, c3 = my_lstm_cell(inputs_, h_p, c_p, weight, bias, forget_bias,
                          param_dtype=jnp.bfloat16)
    jax.block_until_ready((h3, c3))
    assert jnp.allclose(h3, h_ref, atol=5e-2, rtol=5e-2), "h mismatch (bf16)"
    assert jnp.allclose(c3, c_ref, atol=5e-2, rtol=5e-2), "c mismatch (bf16)"

    print("KERNEL_OK")
</pallas_src>

<mosaic_0001>
module attributes {stable_mosaic.version = 11 : i64} {
  func.func @_lstm_cell_kernel(%arg0: i32, %arg1: i32, %arg2: memref<8x128xf32, #tpu.memory_space<vmem>>, %arg3: memref<8x128xf32, #tpu.memory_space<vmem>>, %arg4: memref<8x128xf32, #tpu.memory_space<vmem>>, %arg5: memref<128x512xf32, #tpu.memory_space<vmem>>, %arg6: memref<128x512xf32, #tpu.memory_space<vmem>>, %arg7: memref<1x512xf32, #tpu.memory_space<vmem>>, %arg8: memref<8x128xf32, #tpu.memory_space<vmem>>, %arg9: memref<8x128xf32, #tpu.memory_space<vmem>>) attributes {dimension_semantics = [#tpu.dimension_semantics<parallel>, #tpu.dimension_semantics<parallel>], iteration_bounds = array<i64: 1, 1>, scalar_prefetch = 0 : i64, scratch_operands = 0 : i64, tpu.core_type = #tpu.core_type<tc>, window_params = [{transform_indices = @transform_0, window_bounds = array<i64: 8, 128>}, {transform_indices = @transform_1, window_bounds = array<i64: 8, 128>}, {transform_indices = @transform_2, window_bounds = array<i64: 8, 128>}, {transform_indices = @transform_3, window_bounds = array<i64: 128, 512>}, {transform_indices = @transform_4, window_bounds = array<i64: 128, 512>}, {transform_indices = @transform_5, window_bounds = array<i64: 1, 512>}, {transform_indices = @transform_6, window_bounds = array<i64: 8, 128>}, {transform_indices = @transform_7, window_bounds = array<i64: 8, 128>}]} {
    %c0 = arith.constant 0 : index
    %c0_0 = arith.constant 0 : index
    %0 = vector.load %arg2[%c0, %c0_0] : memref<8x128xf32, #tpu.memory_space<vmem>>, vector<8x128xf32>
    %c0_1 = arith.constant 0 : index
    %c0_2 = arith.constant 0 : index
    %1 = vector.load %arg5[%c0_1, %c0_2] : memref<128x512xf32, #tpu.memory_space<vmem>>, vector<128x512xf32>
    %cst = arith.constant dense<0.000000e+00> : vector<8x512xf32>
    %2 = tpu.matmul %0, %1, %cst {dimension_numbers = #tpu.dot_dimension_numbers<[1], [0], [0], [1], [0, 0, 1, 1], [], []>} : vector<8x128xf32>, vector<128x512xf32>, vector<8x512xf32> -> vector<8x512xf32>
    %c0_3 = arith.constant 0 : index
    %c0_4 = arith.constant 0 : index
    %3 = vector.load %arg3[%c0_3, %c0_4] : memref<8x128xf32, #tpu.memory_space<vmem>>, vector<8x128xf32>
    %c0_5 = arith.constant 0 : index
    %c0_6 = arith.constant 0 : index
    %4 = vector.load %arg6[%c0_5, %c0_6] : memref<128x512xf32, #tpu.memory_space<vmem>>, vector<128x512xf32>
    %cst_7 = arith.constant dense<0.000000e+00> : vector<8x512xf32>
    %5 = tpu.matmul %3, %4, %cst_7 {dimension_numbers = #tpu.dot_dimension_numbers<[1], [0], [0], [1], [0, 0, 1, 1], [], []>} : vector<8x128xf32>, vector<128x512xf32>, vector<8x512xf32> -> vector<8x512xf32>
    %6 = arith.addf %2, %5 : vector<8x512xf32>
    %c0_8 = arith.constant 0 : index
    %c0_9 = arith.constant 0 : index
    %7 = vector.load %arg7[%c0_8, %c0_9] : memref<1x512xf32, #tpu.memory_space<vmem>>, vector<1x512xf32>
    %8 = vector.broadcast %7 : vector<1x512xf32> to vector<8x512xf32>
    %9 = arith.addf %6, %8 : vector<8x512xf32>
    %10 = vector.extract_strided_slice %9 {offsets = [0, 0], sizes = [8, 128], strides = [1, 1]} : vector<8x512xf32> to vector<8x128xf32>
    %11 = vector.extract_strided_slice %9 {offsets = [0, 128], sizes = [8, 128], strides = [1, 1]} : vector<8x512xf32> to vector<8x128xf32>
    %12 = vector.extract_strided_slice %9 {offsets = [0, 256], sizes = [8, 128], strides = [1, 1]} : vector<8x512xf32> to vector<8x128xf32>
    %13 = vector.extract_strided_slice %9 {offsets = [0, 384], sizes = [8, 128], strides = [1, 1]} : vector<8x512xf32> to vector<8x128xf32>
    %c0_10 = arith.constant 0 : index
    %c0_11 = arith.constant 0 : index
    %14 = vector.load %arg4[%c0_10, %c0_11] : memref<8x128xf32, #tpu.memory_space<vmem>>, vector<8x128xf32>
    %cst_12 = arith.constant 5.000000e-01 : f32
    %15 = vector.broadcast %cst_12 : f32 to vector<8x128xf32>
    %16 = arith.mulf %15, %12 : vector<8x128xf32>
    %17 = math.tanh %16 : vector<8x128xf32>
    %cst_13 = arith.constant 5.000000e-01 : f32
    %18 = vector.broadcast %cst_13 : f32 to vector<8x128xf32>
    %19 = arith.mulf %18, %17 : vector<8x128xf32>
    %cst_14 = arith.constant 5.000000e-01 : f32
    %20 = vector.broadcast %cst_14 : f32 to vector<8x128xf32>
    %21 = arith.addf %19, %20 : vector<8x128xf32>
    %22 = arith.mulf %21, %14 : vector<8x128xf32>
    %cst_15 = arith.constant 5.000000e-01 : f32
    %23 = vector.broadcast %cst_15 : f32 to vector<8x128xf32>
    %24 = arith.mulf %23, %10 : vector<8x128xf32>
    %25 = math.tanh %24 : vector<8x128xf32>
    %cst_16 = arith.constant 5.000000e-01 : f32
    %26 = vector.broadcast %cst_16 : f32 to vector<8x128xf32>
    %27 = arith.mulf %26, %25 : vector<8x128xf32>
    %cst_17 = arith.constant 5.000000e-01 : f32
    %28 = vector.broadcast %cst_17 : f32 to vector<8x128xf32>
    %29 = arith.addf %27, %28 : vector<8x128xf32>
    %30 = math.tanh %11 : vector<8x128xf32>
    %31 = arith.mulf %29, %30 : vector<8x128xf32>
    %32 = arith.addf %22, %31 : vector<8x128xf32>
    %cst_18 = arith.constant 5.000000e-01 : f32
    %33 = vector.broadcast %cst_18 : f32 to vector<8x128xf32>
    %34 = arith.mulf %33, %13 : vector<8x128xf32>
    %35 = math.tanh %34 : vector<8x128xf32>
    %cst_19 = arith.constant 5.000000e-01 : f32
    %36 = vector.broadcast %cst_19 : f32 to vector<8x128xf32>
    %37 = arith.mulf %36, %35 : vector<8x128xf32>
    %cst_20 = arith.constant 5.000000e-01 : f32
    %38 = vector.broadcast %cst_20 : f32 to vector<8x128xf32>
    %39 = arith.addf %37, %38 : vector<8x128xf32>
    %40 = math.tanh %32 : vector<8x128xf32>
    %41 = arith.mulf %39, %40 : vector<8x128xf32>
    %c0_21 = arith.constant 0 : index
    %c0_22 = arith.constant 0 : index
    %42 = vector.load %arg8[%c0_21, %c0_22] : memref<8x128xf32, #tpu.memory_space<vmem>>, vector<8x128xf32>
    tpu.vector_store %arg8[%c0_21, %c0_22], %41 {strides = array<i32>} : memref<8x128xf32, #tpu.memory_space<vmem>>, vector<8x128xf32>,
    %c0_23 = arith.constant 0 : index
    %c0_24 = arith.constant 0 : index
    %43 = vector.load %arg9[%c0_23, %c0_24] : memref<8x128xf32, #tpu.memory_space<vmem>>, vector<8x128xf32>
    tpu.vector_store %arg9[%c0_23, %c0_24], %32 {strides = array<i32>} : memref<8x128xf32, #tpu.memory_space<vmem>>, vector<8x128xf32>,
    return
  }
  func.func @transform_0(%arg0: i32, %arg1: i32) -> (i32, i32) {
    %c0_i32 = arith.constant 0 : i32
    %c0_i32_0 = arith.constant 0 : i32
    return %arg1, %c0_i32 : i32, i32
  }
  func.func @transform_1(%arg0: i32, %arg1: i32) -> (i32, i32) {
    %c0_i32 = arith.constant 0 : i32
    %c0_i32_0 = arith.constant 0 : i32
    return %arg1, %c0_i32 : i32, i32
  }
  func.func @transform_2(%arg0: i32, %arg1: i32) -> (i32, i32) {
    %c0_i32 = arith.constant 0 : i32
    return %arg1, %arg0 : i32, i32
  }
  func.func @transform_3(%arg0: i32, %arg1: i32) -> (i32, i32) {
    %c0_i32 = arith.constant 0 : i32
    %c0_i32_0 = arith.constant 0 : i32
    return %c0_i32, %arg0 : i32, i32
  }
  func.func @transform_4(%arg0: i32, %arg1: i32) -> (i32, i32) {
    %c0_i32 = arith.constant 0 : i32
    %c0_i32_0 = arith.constant 0 : i32
    return %c0_i32, %arg0 : i32, i32
  }
  func.func @transform_5(%arg0: i32, %arg1: i32) -> (i32, i32) {
    %c0_i32 = arith.constant 0 : i32
    %c0_i32_0 = arith.constant 0 : i32
    return %c0_i32, %arg0 : i32, i32
  }
  func.func @transform_6(%arg0: i32, %arg1: i32) -> (i32, i32) {
    %c0_i32 = arith.constant 0 : i32
    return %arg1, %arg0 : i32, i32
  }
  func.func @transform_7(%arg0: i32, %arg1: i32) -> (i32, i32) {
    %c0_i32 = arith.constant 0 : i32
    return %arg1, %arg0 : i32, i32
  }
}

</mosaic_0001>

<llo_original>
// kernel: tpu_custom_call.1
$region0: #{tpu_custom_call.1}
  #allocation0 [shape = 'u32[]', space=smem, size = 0x4, offset = 0x4, fixed_abs, tag = 'smem constant byte address 0x4 - core index']
  #allocation1 [shape = 'u32[144,128]{1,0:T(1,128)}', space=vmem, size = 0x12000, scoped, tag = 'internal scratch']
  %s0 = inlined_call_operand.hbm [shape: f32[8,128], index: 0, kind: input, shape index: {}]
  %s1 = inlined_call_operand.hbm [shape: f32[8,128], index: 1, kind: input, shape index: {}]
  %s2 = inlined_call_operand.hbm [shape: f32[8,128], index: 2, kind: input, shape index: {}]
  %s3 = inlined_call_operand.hbm [shape: f32[128,512], index: 3, kind: input, shape index: {}]
  %s4 = inlined_call_operand.hbm [shape: f32[128,512], index: 4, kind: input, shape index: {}]
  %s5 = inlined_call_operand.vmem [shape: f32[1,512], index: 5, kind: input, shape index: {}]
  %s6 = inlined_call_operand.hbm [shape: f32[8,128], index: 6, kind: output, shape index: {0}]
  %s7 = inlined_call_operand.hbm [shape: f32[8,128], index: 7, kind: output, shape index: {1}]
  %8 = xla_tuple %s6, %s7
  %s9 = sld [smem:[#allocation0]]
  $region62: #{tpu_custom_call.1} parent=0
    _
  %s11 = ssub.s32 1, %s9
  %s12 = scalar_select 0, %s11, %s9
  $region1: #{tpu_custom_call.1} parent=0
    #allocation2 [shape = 'u8[4096]{0}', space=vmem, size = 0x1000, scoped, tag = 'input window, operand 0, single buffered']
    #allocation3 [shape = 's32[1]{0}', space=sflag, size = 0x4, scoped, tag = 'scoped memory for tpu_custom_call.1']
    #allocation4 [shape = 's32[1]{0}', space=sflag, size = 0x4, scoped, tag = 'scoped memory for tpu_custom_call.1']
    #allocation5 [shape = 'u8[4096]{0}', space=vmem, size = 0x1000, scoped, tag = 'input window, operand 1, single buffered']
    #allocation6 [shape = 's32[1]{0}', space=sflag, size = 0x4, scoped, tag = 'scoped memory for tpu_custom_call.1']
    #allocation7 [shape = 'u8[4096]{0}', space=vmem, size = 0x1000, scoped, tag = 'input window, operand 2, single buffered']
    #allocation8 [shape = 'u8[262144]{0}', space=vmem, size = 0x40000, scoped, tag = 'input window, operand 3, single buffered']
    #allocation9 [shape = 's32[1]{0}', space=sflag, size = 0x4, scoped, tag = 'scoped memory for tpu_custom_call.1']
    #allocation10 [shape = 'u8[262144]{0}', space=vmem, size = 0x40000, scoped, tag = 'input window, operand 4, single buffered']
    #allocation11 [shape = 'u8[4096]{0}', space=vmem, size = 0x1000, scoped, tag = 'output window, operand 0, single buffered']
    #allocation12 [shape = 'u8[4096]{0}', space=vmem, size = 0x1000, scoped, tag = 'output window, operand 1, single buffered']
    #allocation13 [shape = 's32[1]{0}', space=sflag, size = 0x4, scoped, tag = 'scoped memory for tpu_custom_call.1']
    %13 = vsyncpa [#allocation3], 0
    %14 = vsyncpa [#allocation6], 0
    %15 = vsyncpa [#allocation9], 0
    %16 = vsyncpa [#allocation4], 0
    %17 = vsyncpa [#allocation13], 0
    // Predicated region
    $region2: #{tpu_custom_call.1} parent=1 // pred_check
      _
    $region3: #{tpu_custom_call.1} parent=1 // pred_check_branch
      %19 = sbr.rel (0) target = $region5
    $region4: #{tpu_custom_call.1} parent=1 // pred_region
      %s21 = ssub.s32 128, 128
      %22 = vsyncadd [#allocation3], %s21
      %s24 = sshll.u32 [#allocation2], 4
      %s25 = int_to_ptr.vmem [resolvable:$true] %s24
      %27 = dma.hbm_to_vmem [thread:$0]  %s0, 128, %s25, [#allocation3]
    $region5: #{tpu_custom_call.1} parent=1 // pred_fallthru
      _
    // Predicated region
    $region6: #{tpu_custom_call.1} parent=1 // pred_check
      _
    $region7: #{tpu_custom_call.1} parent=1 // pred_check_branch
      %29 = sbr.rel (0) target = $region9
    $region8: #{tpu_custom_call.1} parent=1 // pred_region
      %s31 = ssub.s32 128, 128
      %32 = vsyncadd [#allocation6], %s31
      %s34 = sshll.u32 [#allocation5], 4
      %s35 = int_to_ptr.vmem [resolvable:$true] %s34
      %37 = dma.hbm_to_vmem [thread:$0]  %s1, 128, %s35, [#allocation6]
    $region9: #{tpu_custom_call.1} parent=1 // pred_fallthru
      _
    // Predicated region
    $region10: #{tpu_custom_call.1} parent=1 // pred_check
      _
    $region11: #{tpu_custom_call.1} parent=1 // pred_check_branch
      %39 = sbr.rel (0) target = $region13
    $region12: #{tpu_custom_call.1} parent=1 // pred_region
      %s41 = ssub.s32 128, 128
      %42 = vsyncadd [#allocation6], %s41
      %s44 = sshll.u32 [#allocation7], 4
      %s45 = int_to_ptr.vmem [resolvable:$true] %s44
      %47 = dma.hbm_to_vmem [thread:$0]  %s2, 128, %s45, [#allocation6]
    $region13: #{tpu_custom_call.1} parent=1 // pred_fallthru
      _
    // Predicated region
    $region14: #{tpu_custom_call.1} parent=1 // pred_check
      _
    $region15: #{tpu_custom_call.1} parent=1 // pred_check_branch
      %49 = sbr.rel (0) target = $region17
    $region16: #{tpu_custom_call.1} parent=1 // pred_region
      %s51 = ssub.s32 8192, 8192
      %52 = vsyncadd [#allocation9], %s51
      %s53 = sshll.u32 [#allocation8], 4
      %s54 = int_to_ptr.vmem [resolvable:$true] %s53
      %59 = dma.hbm_to_vmem [thread:$0]  %s3, 8192, %s54, [#allocation9], 512, 512, 32
    $region17: #{tpu_custom_call.1} parent=1 // pred_fallthru
      _
    // Predicated region
    $region18: #{tpu_custom_call.1} parent=1 // pred_check
      _
    $region19: #{tpu_custom_call.1} parent=1 // pred_check_branch
      %61 = sbr.rel (0) target = $region21
    $region20: #{tpu_custom_call.1} parent=1 // pred_region
      %s63 = ssub.s32 8192, 8192
      %64 = vsyncadd [#allocation9], %s63
      %s65 = sshll.u32 [#allocation10], 4
      %s66 = int_to_ptr.vmem [resolvable:$true] %s65
      %71 = dma.hbm_to_vmem [thread:$0]  %s4, 8192, %s66, [#allocation9], 512, 512, 32
    $region21: #{tpu_custom_call.1} parent=1 // pred_fallthru
      _
    // Predicated region
    $region22: #{tpu_custom_call.1} parent=1 // pred_check
      _
    $region23: #{tpu_custom_call.1} parent=1 // pred_check_branch
      %73 = sbr.rel (0) target = $region25
    $region24: #{tpu_custom_call.1} parent=1 // pred_region
      _
    $region25: #{tpu_custom_call.1} parent=1 // pred_fallthru
      _
    // Predicated region
    $region26: #{tpu_custom_call.1} parent=1 // pred_check
      _
    $region27: #{tpu_custom_call.1} parent=1 // pred_check_branch
      %75 = sbr.rel (0) target = $region29
    $region28: #{tpu_custom_call.1} parent=1 // pred_region
      %76 = dma.done [#allocation3], 128
    $region29: #{tpu_custom_call.1} parent=1 // pred_fallthru
      _
    // Predicated region
    $region30: #{tpu_custom_call.1} parent=1 // pred_check
      _
    $region31: #{tpu_custom_call.1} parent=1 // pred_check_branch
      %78 = sbr.rel (0) target = $region33
    $region32: #{tpu_custom_call.1} parent=1 // pred_region
      %79 = dma.done [#allocation6], 128
    $region33: #{tpu_custom_call.1} parent=1 // pred_fallthru
      _
    // Predicated region
    $region34: #{tpu_custom_call.1} parent=1 // pred_check
      _
    $region35: #{tpu_custom_call.1} parent=1 // pred_check_branch
      %81 = sbr.rel (0) target = $region37
    $region36: #{tpu_custom_call.1} parent=1 // pred_region
      %82 = dma.done [#allocation6], 128
    $region37: #{tpu_custom_call.1} parent=1 // pred_fallthru
      _
    // Predicated region
    $region38: #{tpu_custom_call.1} parent=1 // pred_check
      _
    $region39: #{tpu_custom_call.1} parent=1 // pred_check_branch
      %84 = sbr.rel (0) target = $region41
    $region40: #{tpu_custom_call.1} parent=1 // pred_region
      %85 = dma.done [#allocation9], 8192
    $region41: #{tpu_custom_call.1} parent=1 // pred_fallthru
      _
    // Predicated region
    $region42: #{tpu_custom_call.1} parent=1 // pred_check
      _
    $region43: #{tpu_custom_call.1} parent=1 // pred_check_branch
      %87 = sbr.rel (0) target = $region45
    $region44: #{tpu_custom_call.1} parent=1 // pred_region
      %88 = dma.done [#allocation9], 8192
    $region45: #{tpu_custom_call.1} parent=1 // pred_fallthru
      _
    %v89 = vld [vmem:[#allocation2] sm:$0xff]
    %v90 = vld [vmem:[#allocation8] sm:$0xff]
    %v91 = vld [vmem:[#allocation8 + $0x8] sm:$0xff]
    %v92 = vld [vmem:[#allocation8 + $0x10] sm:$0xff]
    %v93 = vld [vmem:[#allocation8 + $0x18] sm:$0xff]
    %v94 = vld [vmem:[#allocation8 + $0x20] sm:$0xff]
    %v95 = vld [vmem:[#allocation8 + $0x28] sm:$0xff]
    %v96 = vld [vmem:[#allocation8 + $0x30] sm:$0xff]
    %v97 = vld [vmem:[#allocation8 + $0x38] sm:$0xff]
    %v98 = vld [vmem:[#allocation8 + $0x40] sm:$0xff]
    %v99 = vld [vmem:[#allocation8 + $0x48] sm:$0xff]
    %v100 = vld [vmem:[#allocation8 + $0x50] sm:$0xff]
    %v101 = vld [vmem:[#allocation8 + $0x58] sm:$0xff]
    %v102 = vld [vmem:[#allocation8 + $0x60] sm:$0xff]
    %v103 = vld [vmem:[#allocation8 + $0x68] sm:$0xff]
    %v104 = vld [vmem:[#allocation8 + $0x70] sm:$0xff]
    %v105 = vld [vmem:[#allocation8 + $0x78] sm:$0xff]
    %v106 = vld [vmem:[#allocation8 + $0x80] sm:$0xff]
    %v107 = vld [vmem:[#allocation8 + $0x88] sm:$0xff]
    %v108 = vld [vmem:[#allocation8 + $0x90] sm:$0xff]
    %v109 = vld [vmem:[#allocation8 + $0x98] sm:$0xff]
    %v110 = vld [vmem:[#allocation8 + $0xa0] sm:$0xff]
    %v111 = vld [vmem:[#allocation8 + $0xa8] sm:$0xff]
    %v112 = vld [vmem:[#allocation8 + $0xb0] sm:$0xff]
    %v113 = vld [vmem:[#allocation8 + $0xb8] sm:$0xff]
    %v114 = vld [vmem:[#allocation8 + $0xc0] sm:$0xff]
    %v115 = vld [vmem:[#allocation8 + $0xc8] sm:$0xff]
    %v116 = vld [vmem:[#allocation8 + $0xd0] sm:$0xff]
    %v117 = vld [vmem:[#allocation8 + $0xd8] sm:$0xff]
    %v118 = vld [vmem:[#allocation8 + $0xe0] sm:$0xff]
    %v119 = vld [vmem:[#allocation8 + $0xe8] sm:$0xff]
    %v120 = vld [vmem:[#allocation8 + $0xf0] sm:$0xff]
    %v121 = vld [vmem:[#allocation8 + $0xf8] sm:$0xff]
    %v122 = vld [vmem:[#allocation8 + $0x100] sm:$0xff]
    %v123 = vld [vmem:[#allocation8 + $0x108] sm:$0xff]
    %v124 = vld [vmem:[#allocation8 + $0x110] sm:$0xff]
    %v125 = vld [vmem:[#allocation8 + $0x118] sm:$0xff]
    %v126 = vld [vmem:[#allocation8 + $0x120] sm:$0xff]
    %v127 = vld [vmem:[#allocation8 + $0x128] sm:$0xff]
    %v128 = vld [vmem:[#allocation8 + $0x130] sm:$0xff]
    %v129 = vld [vmem:[#allocation8 + $0x138] sm:$0xff]
    %v130 = vld [vmem:[#allocation8 + $0x140] sm:$0xff]
    %v131 = vld [vmem:[#allocation8 + $0x148] sm:$0xff]
    %v132 = vld [vmem:[#allocation8 + $0x150] sm:$0xff]
    %v133 = vld [vmem:[#allocation8 + $0x158] sm:$0xff]
    %v134 = vld [vmem:[#allocation8 + $0x160] sm:$0xff]
    %v135 = vld [vmem:[#allocation8 + $0x168] sm:$0xff]
    %v136 = vld [vmem:[#allocation8 + $0x170] sm:$0xff]
    %v137 = vld [vmem:[#allocation8 + $0x178] sm:$0xff]
    %v138 = vld [vmem:[#allocation8 + $0x180] sm:$0xff]
    %v139 = vld [vmem:[#allocation8 + $0x188] sm:$0xff]
    %v140 = vld [vmem:[#allocation8 + $0x190] sm:$0xff]
    %v141 = vld [vmem:[#allocation8 + $0x198] sm:$0xff]
    %v142 = vld [vmem:[#allocation8 + $0x1a0] sm:$0xff]
    %v143 = vld [vmem:[#allocation8 + $0x1a8] sm:$0xff]
    %v144 = vld [vmem:[#allocation8 + $0x1b0] sm:$0xff]
    %v145 = vld [vmem:[#allocation8 + $0x1b8] sm:$0xff]
    %v146 = vld [vmem:[#allocation8 + $0x1c0] sm:$0xff]
    %v147 = vld [vmem:[#allocation8 + $0x1c8] sm:$0xff]
    %v148 = vld [vmem:[#allocation8 + $0x1d0] sm:$0xff]
    %v149 = vld [vmem:[#allocation8 + $0x1d8] sm:$0xff]
    %v150 = vld [vmem:[#allocation8 + $0x1e0] sm:$0xff]
    %v151 = vld [vmem:[#allocation8 + $0x1e8] sm:$0xff]
    %v152 = vld [vmem:[#allocation8 + $0x1f0] sm:$0xff]
    %v153 = vld [vmem:[#allocation8 + $0x1f8] sm:$0xff]
    %v154 = vld [vmem:[#allocation5] sm:$0xff]
    %v155 = vld [vmem:[#allocation10] sm:$0xff]
    %v156 = vld [vmem:[#allocation10 + $0x8] sm:$0xff]
    %v157 = vld [vmem:[#allocation10 + $0x10] sm:$0xff]
    %v158 = vld [vmem:[#allocation10 + $0x18] sm:$0xff]
    %v159 = vld [vmem:[#allocation10 + $0x20] sm:$0xff]
    %v160 = vld [vmem:[#allocation10 + $0x28] sm:$0xff]
    %v161 = vld [vmem:[#allocation10 + $0x30] sm:$0xff]
    %v162 = vld [vmem:[#allocation10 + $0x38] sm:$0xff]
    %v163 = vld [vmem:[#allocation10 + $0x40] sm:$0xff]
    %v164 = vld [vmem:[#allocation10 + $0x48] sm:$0xff]
    %v165 = vld [vmem:[#allocation10 + $0x50] sm:$0xff]
    %v166 = vld [vmem:[#allocation10 + $0x58] sm:$0xff]
    %v167 = vld [vmem:[#allocation10 + $0x60] sm:$0xff]
    %v168 = vld [vmem:[#allocation10 + $0x68] sm:$0xff]
    %v169 = vld [vmem:[#allocation10 + $0x70] sm:$0xff]
    %v170 = vld [vmem:[#allocation10 + $0x78] sm:$0xff]
    %v171 = vld [vmem:[#allocation10 + $0x80] sm:$0xff]
    %v172 = vld [vmem:[#allocation10 + $0x88] sm:$0xff]
    %v173 = vld [vmem:[#allocation10 + $0x90] sm:$0xff]
    %v174 = vld [vmem:[#allocation10 + $0x98] sm:$0xff]
    %v175 = vld [vmem:[#allocation10 + $0xa0] sm:$0xff]
    %v176 = vld [vmem:[#allocation10 + $0xa8] sm:$0xff]
    %v177 = vld [vmem:[#allocation10 + $0xb0] sm:$0xff]
    %v178 = vld [vmem:[#allocation10 + $0xb8] sm:$0xff]
    %v179 = vld [vmem:[#allocation10 + $0xc0] sm:$0xff]
    %v180 = vld [vmem:[#allocation10 + $0xc8] sm:$0xff]
    %v181 = vld [vmem:[#allocation10 + $0xd0] sm:$0xff]
    %v182 = vld [vmem:[#allocation10 + $0xd8] sm:$0xff]
    %v183 = vld [vmem:[#allocation10 + $0xe0] sm:$0xff]
    %v184 = vld [vmem:[#allocation10 + $0xe8] sm:$0xff]
    %v185 = vld [vmem:[#allocation10 + $0xf0] sm:$0xff]
    %v186 = vld [vmem:[#allocation10 + $0xf8] sm:$0xff]
    %v187 = vld [vmem:[#allocation10 + $0x100] sm:$0xff]
    %v188 = vld [vmem:[#allocation10 + $0x108] sm:$0xff]
    %v189 = vld [vmem:[#allocation10 + $0x110] sm:$0xff]
    %v190 = vld [vmem:[#allocation10 + $0x118] sm:$0xff]
    %v191 = vld [vmem:[#allocation10 + $0x120] sm:$0xff]
    %v192 = vld [vmem:[#allocation10 + $0x128] sm:$0xff]
    %v193 = vld [vmem:[#allocation10 + $0x130] sm:$0xff]
    %v194 = vld [vmem:[#allocation10 + $0x138] sm:$0xff]
    %v195 = vld [vmem:[#allocation10 + $0x140] sm:$0xff]
    %v196 = vld [vmem:[#allocation10 + $0x148] sm:$0xff]
    %v197 = vld [vmem:[#allocation10 + $0x150] sm:$0xff]
    %v198 = vld [vmem:[#allocation10 + $0x158] sm:$0xff]
    %v199 = vld [vmem:[#allocation10 + $0x160] sm:$0xff]
    %v200 = vld [vmem:[#allocation10 + $0x168] sm:$0xff]
    %v201 = vld [vmem:[#allocation10 + $0x170] sm:$0xff]
    %v202 = vld [vmem:[#allocation10 + $0x178] sm:$0xff]
    %v203 = vld [vmem:[#allocation10 + $0x180] sm:$0xff]
    %v204 = vld [vmem:[#allocation10 + $0x188] sm:$0xff]
    %v205 = vld [vmem:[#allocation10 + $0x190] sm:$0xff]
    %v206 = vld [vmem:[#allocation10 + $0x198] sm:$0xff]
    %v207 = vld [vmem:[#allocation10 + $0x1a0] sm:$0xff]
    %v208 = vld [vmem:[#allocation10 + $0x1a8] sm:$0xff]
    %v209 = vld [vmem:[#allocation10 + $0x1b0] sm:$0xff]
    %v210 = vld [vmem:[#allocation10 + $0x1b8] sm:$0xff]
    %v211 = vld [vmem:[#allocation10 + $0x1c0] sm:$0xff]
    %v212 = vld [vmem:[#allocation10 + $0x1c8] sm:$0xff]
    %v213 = vld [vmem:[#allocation10 + $0x1d0] sm:$0xff]
    %v214 = vld [vmem:[#allocation10 + $0x1d8] sm:$0xff]
    %v215 = vld [vmem:[#allocation10 + $0x1e0] sm:$0xff]
    %v216 = vld [vmem:[#allocation10 + $0x1e8] sm:$0xff]
    %v217 = vld [vmem:[#allocation10 + $0x1f0] sm:$0xff]
    %v218 = vld [vmem:[#allocation10 + $0x1f8] sm:$0xff]
    %219 = vmatprep.subr.mxu0 %v156
    %220 = vmatpush1.msra.mxu0 %v155
    %221 = vmatprep.subr.mxu0 %v160
    %222 = vmatpush1.msra.mxu0 %v159
    %223 = vmatprep.subr.mxu0 %v164
    %224 = vmatpush1.msra.mxu0 %v163
    %225 = vmatprep.subr.mxu0 %v168
    %226 = vmatpush1.msra.mxu0 %v167
    %227 = vmatprep.subr.mxu0 %v172
    %228 = vmatpush1.msra.mxu0 %v171
    %229 = vmatprep.subr.mxu0 %v176
    %230 = vmatpush1.msra.mxu0 %v175
    %231 = vmatprep.subr.mxu0 %v180
    %232 = vmatpush1.msra.mxu0 %v179
    %233 = vmatprep.subr.mxu0 %v184
    %234 = vmatpush1.msra.mxu0 %v183
    %235 = vmatprep.subr.mxu0 %v188
    %236 = vmatpush1.msra.mxu0 %v187
    %237 = vmatprep.subr.mxu0 %v192
    %238 = vmatpush1.msra.mxu0 %v191
    %239 = vmatprep.subr.mxu0 %v196
    %240 = vmatpush1.msra.mxu0 %v195
    %241 = vmatprep.subr.mxu0 %v200
    %242 = vmatpush1.msra.mxu0 %v199
    %243 = vmatprep.subr.mxu0 %v204
    %244 = vmatpush1.msra.mxu0 %v203
    %245 = vmatprep.subr.mxu0 %v208
    %246 = vmatpush1.msra.mxu0 %v207
    %247 = vmatprep.subr.mxu0 %v212
    %248 = vmatpush1.msra.mxu0 %v211
    %249 = vmatprep.subr.mxu0 %v216
    %250 = vmatpush1.msra.mxu0 %v215
    %251 = vmatprep.subr.mxu0 0.0
    %252 = vmatpush1.msra.mxu0 0.0
    %253 = vmatprep.subr.mxu0 0.0
    %254 = vmatpush1.msra.mxu0 0.0
    %255 = vmatprep.subr.mxu0 0.0
    %256 = vmatpush1.msra.mxu0 0.0
    %257 = vmatprep.subr.mxu0 0.0
    %258 = vmatpush1.msra.mxu0 0.0
    %259 = vmatprep.subr.mxu0 0.0
    %260 = vmatpush1.msra.mxu0 0.0
    %261 = vmatprep.subr.mxu0 0.0
    %262 = vmatpush1.msra.mxu0 0.0
    %263 = vmatprep.subr.mxu0 0.0
    %264 = vmatpush1.msra.mxu0 0.0
    %265 = vmatprep.subr.mxu0 0.0
    %266 = vmatpush1.msra.mxu0 0.0
    %267 = vmatprep.subr.mxu0 0.0
    %268 = vmatpush1.msra.mxu0 0.0
    %269 = vmatprep.subr.mxu0 0.0
    %270 = vmatpush1.msra.mxu0 0.0
    %271 = vmatprep.subr.mxu0 0.0
    %272 = vmatpush1.msra.mxu0 0.0
    %273 = vmatprep.subr.mxu0 0.0
    %274 = vmatpush1.msra.mxu0 0.0
    %275 = vmatprep.subr.mxu0 0.0
    %276 = vmatpush1.msra.mxu0 0.0
    %277 = vmatprep.subr.mxu0 0.0
    %278 = vmatpush1.msra.mxu0 0.0
    %279 = vmatprep.subr.mxu0 0.0
    %280 = vmatpush1.msra.mxu0 0.0
    %281 = vmatprep.subr.mxu0 0.0
    %282 = vmatpush1.msra.mxu0 0.0
    %283 = vmatprep.mubr.f32.mxu0 0.0
    %284 = vmatmul.mubr.f32.gmra.mrb[0].mxu0 %v154
    %v285 = vpop.f32.mrb[0].mxu0
    %v286 = vadd.f32 0.0, %v285
    %v287 = vpop.f32.mrb[0].mxu0
    %v288 = vadd.f32 0.0, %v287
    %289 = vdwg.mxu0
    %290 = vmatprep.subr.mxu0 %v158
    %291 = vmatpush1.msra.mxu0 %v157
    %292 = vmatprep.subr.mxu0 %v162
    %293 = vmatpush1.msra.mxu0 %v161
    %294 = vmatprep.subr.mxu0 %v166
    %295 = vmatpush1.msra.mxu0 %v165
    %296 = vmatprep.subr.mxu0 %v170
    %297 = vmatpush1.msra.mxu0 %v169
    %298 = vmatprep.subr.mxu0 %v174
    %299 = vmatpush1.msra.mxu0 %v173
    %300 = vmatprep.subr.mxu0 %v178
    %301 = vmatpush1.msra.mxu0 %v177
    %302 = vmatprep.subr.mxu0 %v182
    %303 = vmatpush1.msra.mxu0 %v181
    %304 = vmatprep.subr.mxu0 %v186
    %305 = vmatpush1.msra.mxu0 %v185
    %306 = vmatprep.subr.mxu0 %v190
    %307 = vmatpush1.msra.mxu0 %v189
    %308 = vmatprep.subr.mxu0 %v194
    %309 = vmatpush1.msra.mxu0 %v193
    %310 = vmatprep.subr.mxu0 %v198
    %311 = vmatpush1.msra.mxu0 %v197
    %312 = vmatprep.subr.mxu0 %v202
    %313 = vmatpush1.msra.mxu0 %v201
    %314 = vmatprep.subr.mxu0 %v206
    %315 = vmatpush1.msra.mxu0 %v205
    %316 = vmatprep.subr.mxu0 %v210
    %317 = vmatpush1.msra.mxu0 %v209
    %318 = vmatprep.subr.mxu0 %v214
    %319 = vmatpush1.msra.mxu0 %v213
    %320 = vmatprep.subr.mxu0 %v218
    %321 = vmatpush1.msra.mxu0 %v217
    %322 = vmatprep.subr.mxu0 0.0
    %323 = vmatpush1.msra.mxu0 0.0
    %324 = vmatprep.subr.mxu0 0.0
    %325 = vmatpush1.msra.mxu0 0.0
    %326 = vmatprep.subr.mxu0 0.0
    %327 = vmatpush1.msra.mxu0 0.0
    %328 = vmatprep.subr.mxu0 0.0
    %329 = vmatpush1.msra.mxu0 0.0
    %330 = vmatprep.subr.mxu0 0.0
    %331 = vmatpush1.msra.mxu0 0.0
    %332 = vmatprep.subr.mxu0 0.0
    %333 = vmatpush1.msra.mxu0 0.0
    %334 = vmatprep.subr.mxu0 0.0
    %335 = vmatpush1.msra.mxu0 0.0
    %336 = vmatprep.subr.mxu0 0.0
    %337 = vmatpush1.msra.mxu0 0.0
    %338 = vmatprep.subr.mxu0 0.0
    %339 = vmatpush1.msra.mxu0 0.0
    %340 = vmatprep.subr.mxu0 0.0
    %341 = vmatpush1.msra.mxu0 0.0
    %342 = vmatprep.subr.mxu0 0.0
    %343 = vmatpush1.msra.mxu0 0.0
    %344 = vmatprep.subr.mxu0 0.0
    %345 = vmatpush1.msra.mxu0 0.0
    %346 = vmatprep.subr.mxu0 0.0
    %347 = vmatpush1.msra.mxu0 0.0
    %348 = vmatprep.subr.mxu0 0.0
    %349 = vmatpush1.msra.mxu0 0.0
    %350 = vmatprep.subr.mxu0 0.0
    %351 = vmatpush1.msra.mxu0 0.0
    %352 = vmatprep.subr.mxu0 0.0
    %353 = vmatpush1.msra.mxu0 0.0
    %354 = vmatprep.mubr.f32.mxu0 0.0
    %355 = vmatmul.mubr.f32.gmra.mrb[0].mxu0 %v154
    %v356 = vpop.f32.mrb[0].mxu0
    %v357 = vadd.f32 0.0, %v356
    %v358 = vpop.f32.mrb[0].mxu0
    %v359 = vadd.f32 0.0, %v358
    %360 = vdwg.mxu0
    %361 = vmatprep.subr.mxu0 %v91
    %362 = vmatpush1.msra.mxu0 %v90
    %363 = vmatprep.subr.mxu0 %v95
    %364 = vmatpush1.msra.mxu0 %v94
    %365 = vmatprep.subr.mxu0 %v99
    %366 = vmatpush1.msra.mxu0 %v98
    %367 = vmatprep.subr.mxu0 %v103
    %368 = vmatpush1.msra.mxu0 %v102
    %369 = vmatprep.subr.mxu0 %v107
    %370 = vmatpush1.msra.mxu0 %v106
    %371 = vmatprep.subr.mxu0 %v111
    %372 = vmatpush1.msra.mxu0 %v110
    %373 = vmatprep.subr.mxu0 %v115
    %374 = vmatpush1.msra.mxu0 %v114
    %375 = vmatprep.subr.mxu0 %v119
    %376 = vmatpush1.msra.mxu0 %v118
    %377 = vmatprep.subr.mxu0 %v123
    %378 = vmatpush1.msra.mxu0 %v122
    %379 = vmatprep.subr.mxu0 %v127
    %380 = vmatpush1.msra.mxu0 %v126
    %381 = vmatprep.subr.mxu0 %v131
    %382 = vmatpush1.msra.mxu0 %v130
    %383 = vmatprep.subr.mxu0 %v135
    %384 = vmatpush1.msra.mxu0 %v134
    %385 = vmatprep.subr.mxu0 %v139
    %386 = vmatpush1.msra.mxu0 %v138
    %387 = vmatprep.subr.mxu0 %v143
    %388 = vmatpush1.msra.mxu0 %v142
    %389 = vmatprep.subr.mxu0 %v147
    %390 = vmatpush1.msra.mxu0 %v146
    %391 = vmatprep.subr.mxu0 %v151
    %392 = vmatpush1.msra.mxu0 %v150
    %393 = vmatprep.subr.mxu0 0.0
    %394 = vmatpush1.msra.mxu0 0.0
    %395 = vmatprep.subr.mxu0 0.0
    %396 = vmatpush1.msra.mxu0 0.0
    %397 = vmatprep.subr.mxu0 0.0
    %398 = vmatpush1.msra.mxu0 0.0
    %399 = vmatprep.subr.mxu0 0.0
    %400 = vmatpush1.msra.mxu0 0.0
    %401 = vmatprep.subr.mxu0 0.0
    %402 = vmatpush1.msra.mxu0 0.0
    %403 = vmatprep.subr.mxu0 0.0
    %404 = vmatpush1.msra.mxu0 0.0
    %405 = vmatprep.subr.mxu0 0.0
    %406 = vmatpush1.msra.mxu0 0.0
    %407 = vmatprep.subr.mxu0 0.0
    %408 = vmatpush1.msra.mxu0 0.0
    %409 = vmatprep.subr.mxu0 0.0
    %410 = vmatpush1.msra.mxu0 0.0
    %411 = vmatprep.subr.mxu0 0.0
    %412 = vmatpush1.msra.mxu0 0.0
    %413 = vmatprep.subr.mxu0 0.0
    %414 = vmatpush1.msra.mxu0 0.0
    %415 = vmatprep.subr.mxu0 0.0
    %416 = vmatpush1.msra.mxu0 0.0
    %417 = vmatprep.subr.mxu0 0.0
    %418 = vmatpush1.msra.mxu0 0.0
    %419 = vmatprep.subr.mxu0 0.0
    %420 = vmatpush1.msra.mxu0 0.0
    %421 = vmatprep.subr.mxu0 0.0
    %422 = vmatpush1.msra.mxu0 0.0
    %423 = vmatprep.subr.mxu0 0.0
    %424 = vmatpush1.msra.mxu0 0.0
    %425 = vmatprep.mubr.f32.mxu0 0.0
    %426 = vmatmul.mubr.f32.gmra.mrb[0].mxu0 %v89
    %v427 = vpop.f32.mrb[0].mxu0
    %v428 = vadd.f32 %v286, %v427
    %v429 = vpop.f32.mrb[0].mxu0
    %v430 = vadd.f32 %v288, %v429
    %431 = vdwg.mxu0
    %432 = vmatprep.subr.mxu0 %v93
    %433 = vmatpush1.msra.mxu0 %v92
    %434 = vmatprep.subr.mxu0 %v97
    %435 = vmatpush1.msra.mxu0 %v96
    %436 = vmatprep.subr.mxu0 %v101
    %437 = vmatpush1.msra.mxu0 %v100
    %438 = vmatprep.subr.mxu0 %v105
    %439 = vmatpush1.msra.mxu0 %v104
    %440 = vmatprep.subr.mxu0 %v109
    %441 = vmatpush1.msra.mxu0 %v108
    %442 = vmatprep.subr.mxu0 %v113
    %443 = vmatpush1.msra.mxu0 %v112
    %444 = vmatprep.subr.mxu0 %v117
    %445 = vmatpush1.msra.mxu0 %v116
    %446 = vmatprep.subr.mxu0 %v121
    %447 = vmatpush1.msra.mxu0 %v120
    %448 = vmatprep.subr.mxu0 %v125
    %449 = vmatpush1.msra.mxu0 %v124
    %450 = vmatprep.subr.mxu0 %v129
    %451 = vmatpush1.msra.mxu0 %v128
    %452 = vmatprep.subr.mxu0 %v133
    %453 = vmatpush1.msra.mxu0 %v132
    %454 = vmatprep.subr.mxu0 %v137
    %455 = vmatpush1.msra.mxu0 %v136
    %456 = vmatprep.subr.mxu0 %v141
    %457 = vmatpush1.msra.mxu0 %v140
    %458 = vmatprep.subr.mxu0 %v145
    %459 = vmatpush1.msra.mxu0 %v144
    %460 = vmatprep.subr.mxu0 %v149
    %461 = vmatpush1.msra.mxu0 %v148
    %462 = vmatprep.subr.mxu0 %v153
    %463 = vmatpush1.msra.mxu0 %v152
    %464 = vmatprep.subr.mxu0 0.0
    %465 = vmatpush1.msra.mxu0 0.0
    %466 = vmatprep.subr.mxu0 0.0
    %467 = vmatpush1.msra.mxu0 0.0
    %468 = vmatprep.subr.mxu0 0.0
    %469 = vmatpush1.msra.mxu0 0.0
    %470 = vmatprep.subr.mxu0 0.0
    %471 = vmatpush1.msra.mxu0 0.0
    %472 = vmatprep.subr.mxu0 0.0
    %473 = vmatpush1.msra.mxu0 0.0
    %474 = vmatprep.subr.mxu0 0.0
    %475 = vmatpush1.msra.mxu0 0.0
    %476 = vmatprep.subr.mxu0 0.0
    %477 = vmatpush1.msra.mxu0 0.0
    %478 = vmatprep.subr.mxu0 0.0
    %479 = vmatpush1.msra.mxu0 0.0
    %480 = vmatprep.subr.mxu0 0.0
    %481 = vmatpush1.msra.mxu0 0.0
    %482 = vmatprep.subr.mxu0 0.0
    %483 = vmatpush1.msra.mxu0 0.0
    %484 = vmatprep.subr.mxu0 0.0
    %485 = vmatpush1.msra.mxu0 0.0
    %486 = vmatprep.subr.mxu0 0.0
    %487 = vmatpush1.msra.mxu0 0.0
    %488 = vmatprep.subr.mxu0 0.0
    %489 = vmatpush1.msra.mxu0 0.0
    %490 = vmatprep.subr.mxu0 0.0
    %491 = vmatpush1.msra.mxu0 0.0
    %492 = vmatprep.subr.mxu0 0.0
    %493 = vmatpush1.msra.mxu0 0.0
    %494 = vmatprep.subr.mxu0 0.0
    %495 = vmatpush1.msra.mxu0 0.0
    %496 = vmatprep.mubr.f32.mxu0 0.0
    %497 = vmatmul.mubr.f32.gmra.mrb[0].mxu0 %v89
    %v498 = vpop.f32.mrb[0].mxu0
    %v499 = vadd.f32 %v357, %v498
    %v500 = vpop.f32.mrb[0].mxu0
    %v501 = vadd.f32 %v359, %v500
    %502 = vdwg.mxu0
    %v503 = vld [vmem:[%s5] sm:$0xf]
    %v505 = vlaneseq
    %v506 = vshrl.u32 %v505, 7
    %v507 = vsub.s32 0, %v506
    %v508 = vrot.slane %v503, %v507
    %v509 = vlaneseq
    %v510 = vshrl.u32 %v509, 7
    %v511 = vsub.s32 1, %v510
    %v512 = vrot.slane %v503, %v511
    %v513 = vlaneseq
    %v514 = vshrl.u32 %v513, 7
    %v515 = vsub.s32 2, %v514
    %v516 = vrot.slane %v503, %v515
    %v517 = vlaneseq
    %v518 = vshrl.u32 %v517, 7
    %v519 = vsub.s32 3, %v518
    %v520 = vrot.slane %v503, %v519
    %v525 = vadd.f32 %v428, %v508
    %v526 = vadd.f32 %v430, %v512
    %v527 = vadd.f32 %v499, %v516
    %v528 = vadd.f32 %v501, %v520
    %v529 = vld [vmem:[#allocation7] sm:$0xff]
    %v530 = vmul.f32 %v527, 0.5
    %v531 = vtanh.pop %v530
    %v532 = vmul.f32 %v531, 0.5
    %v533 = vadd.f32 %v532, 0.5
    %v534 = vmul.f32 %v533, %v529
    %v535 = vmul.f32 %v525, 0.5
    %v536 = vtanh.pop %v535
    %v537 = vmul.f32 %v536, 0.5
    %v538 = vadd.f32 %v537, 0.5
    %v539 = vtanh.pop %v526
    %v540 = vmul.f32 %v538, %v539
    %v541 = vadd.f32 %v534, %v540
    %v542 = vmul.f32 %v528, 0.5
    %v543 = vtanh.pop %v542
    %v544 = vmul.f32 %v543, 0.5
    %v545 = vadd.f32 %v544, 0.5
    %v546 = vtanh.pop %v541
    %v547 = vmul.f32 %v545, %v546
    %548 = vst [vmem:[#allocation11] sm:$0xff] %v547
    %549 = vst [vmem:[#allocation12] sm:$0xff] %v541
    // Predicated region
    $region46: #{tpu_custom_call.1} parent=1 // pred_check
      _
    $region47: #{tpu_custom_call.1} parent=1 // pred_check_branch
      %551 = sbr.rel (0) target = $region49
    $region48: #{tpu_custom_call.1} parent=1 // pred_region
      %s553 = ssub.s32 128, 128
      %554 = vsyncadd [#allocation4], %s553
      %s556 = sshll.u32 [#allocation11], 4
      %s557 = int_to_ptr.vmem [resolvable:$true] %s556
      %559 = dma.vmem_to_hbm [thread:$0]  %s557, 128, %s6, [#allocation4]
    $region49: #{tpu_custom_call.1} parent=1 // pred_fallthru
      _
    // Predicated region
    $region50: #{tpu_custom_call.1} parent=1 // pred_check
      _
    $region51: #{tpu_custom_call.1} parent=1 // pred_check_branch
      %561 = sbr.rel (0) target = $region53
    $region52: #{tpu_custom_call.1} parent=1 // pred_region
      %s563 = ssub.s32 128, 128
      %564 = vsyncadd [#allocation13], %s563
      %s566 = sshll.u32 [#allocation12], 4
      %s567 = int_to_ptr.vmem [resolvable:$true] %s566
      %569 = dma.vmem_to_hbm [thread:$0]  %s567, 128, %s7, [#allocation13]
    $region53: #{tpu_custom_call.1} parent=1 // pred_fallthru
      _
    // Predicated region
    $region54: #{tpu_custom_call.1} parent=1 // pred_check
      _
    $region55: #{tpu_custom_call.1} parent=1 // pred_check_branch
      %571 = sbr.rel (0) target = $region57
    $region56: #{tpu_custom_call.1} parent=1 // pred_region
      %572 = dma.done [#allocation4], 128
    $region57: #{tpu_custom_call.1} parent=1 // pred_fallthru
      _
    // Predicated region
    $region58: #{tpu_custom_call.1} parent=1 // pred_check
      _
    $region59: #{tpu_custom_call.1} parent=1 // pred_check_branch
      %574 = sbr.rel (0) target = $region61
    $region60: #{tpu_custom_call.1} parent=1 // pred_region
      %575 = dma.done [#allocation13], 128
    $region61: #{tpu_custom_call.1} parent=1 // pred_fallthru
      _
    %576 = vsyncpa [#allocation3], 1
    %577 = vsyncpa [#allocation6], 1
    %578 = vsyncpa [#allocation9], 1
    %579 = vsyncpa [#allocation4], 1
    %580 = vsyncpa [#allocation13], 1

</llo_original>
